<compile_context>
chip_gen: v5e
topology: v5e:2x2
jax: 0.10.0
libtpu: 0.0.40
codegen_flags: <defaults>
</compile_context>

<pallas_src>
import jax
import jax.numpy as jnp
from jax.experimental import pallas as pl
from jax.experimental.pallas import tpu as pltpu

DEFAULT_SMOOTHING = 0.01


def _make_kernel(n_total: int, smoothing: float):
    confidence = 1.0 - smoothing

    def kernel(x_ref, t_ref, out_ref, acc_ref):
        shard = pl.program_id(0)
        step = pl.program_id(1)
        steps = pl.num_programs(1)

        @pl.when(step == 0)
        def _init():
            acc_ref[...] = jnp.zeros_like(acc_ref)

        x = x_ref[...].astype(jnp.float32)                       # (T, C)
        t_n, c = x.shape

        # log-sum-exp pieces (no logprobs materialized)
        m = jnp.max(x, axis=-1, keepdims=True)                   # (T, 1)
        shifted = x - m                                          # (T, C)
        lse = jnp.log(jnp.sum(jnp.exp(shifted), axis=-1, keepdims=True))  # (T, 1)

        # Fused gather + mean: one weighted lane-reduce.
        #   conf*(lse - shifted[t]) + smooth*(lse - mean(shifted))
        # = lse - sum(w * shifted),  w_j = smooth/C + conf*[j == t]
        cls_ids = jax.lax.broadcasted_iota(jnp.int32, (t_n, c), 1)
        tgt = t_ref[...]                                         # (T, 1) int32
        base_w = smoothing / c
        w = jnp.where(cls_ids == tgt, confidence + base_w, base_w)
        weighted = jnp.sum(w * shifted, axis=-1, keepdims=True)  # (T, 1)
        loss = lse - weighted                                    # (T, 1)

        # Mask padded rows (ragged last tile / clamped duplicated tiles).
        # Keep this a select: padded rows may hold garbage -> inf/NaN in lse.
        logical_tile = shard * steps + step
        row_ids = (jax.lax.broadcasted_iota(jnp.int32, (t_n, 1), 0)
                   + logical_tile * t_n)
        loss = jnp.where(row_ids < n_total, loss, 0.0)

        acc_ref[...] += loss

        @pl.when(step == steps - 1)
        def _finalize():
            out_ref[...] = jnp.broadcast_to(jnp.sum(acc_ref[...]), out_ref.shape)

    return kernel


def _device_budget():
    """(f32 working-set byte target per tile, vmem_limit_bytes) keyed off VMEM size."""
    try:
        vmem = pltpu.get_tpu_info().vmem_capacity_bytes
    except Exception:
        vmem = 64 << 20                 # conservative fallback: assume v7x-sized VMEM
    if vmem >= (100 << 20):             # v5e / v6e: 128 MiB VMEM
        return 8 << 20, 96 << 20
    return 3 << 20, 40 << 20            # v7x: 64 MiB physical VMEM


def _choose_tile_n(n: int, c: int, itemsize: int, ws_budget_bytes: int) -> int:
    # Budget by the f32 (T, C) working set (the kernel materializes a few f32
    # temporaries of that size), not by the raw input itemsize.
    align = max(8, 32 // itemsize)      # sublane packing: 8 (f32), 16 (bf16), 32 (i8)
    t = ws_budget_bytes // max(1, c * 4)
    t = max(align, min(4096, (t // align) * align))
    if t >= n:
        return n                        # single full block; always legal
    return t


def label_smoothing_loss(x, target, smoothing=DEFAULT_SMOOTHING, tile_n=None,
                         num_shards=2):
    """x: (N, C) float logits (f32 or bf16), target: (N,) int labels -> scalar f32 loss."""
    n, c = x.shape
    itemsize = jnp.dtype(x.dtype).itemsize
    ws_budget, vmem_limit = _device_budget()
    if tile_n is None:
        tile_n = _choose_tile_n(n, c, itemsize, ws_budget)

    total_tiles = pl.cdiv(n, tile_n)
    shards = max(1, min(int(num_shards), int(total_tiles)))
    steps = pl.cdiv(total_tiles, shards)

    t2d = target.astype(jnp.int32).reshape(n, 1)

    def in_map(s, i):
        # Clamp so duplicated trailing steps re-read the last valid tile
        # (their rows are masked out inside the kernel).
        return (jnp.minimum(s * steps + i, total_tiles - 1), 0)

    cost = pl.CostEstimate(
        flops=6 * n * c,
        transcendentals=n * c,
        bytes_accessed=n * c * itemsize + n * 4 + shards * 8 * 128 * 4,
    )

    partials = pl.pallas_call(
        _make_kernel(n, float(smoothing)),
        out_shape=jax.ShapeDtypeStruct((shards, 8, 128), jnp.float32),
        grid=(shards, steps),
        in_specs=[
            pl.BlockSpec((tile_n, c), in_map),
            pl.BlockSpec((tile_n, 1), in_map),
        ],
        out_specs=pl.BlockSpec((1, 8, 128), lambda s, i: (s, 0, 0)),
        scratch_shapes=[pltpu.VMEM((tile_n, 1), jnp.float32)],
        compiler_params=pltpu.CompilerParams(
            dimension_semantics=("parallel", "arbitrary"),
            vmem_limit_bytes=vmem_limit,
        ),
        cost_estimate=cost,
    )(x, t2d)

    return jnp.sum(partials[:, 0, 0]) * (1.0 / n)


if __name__ == "__main__":
    key = jax.random.PRNGKey(0)
    kx, kt = jax.random.split(key)

    def ref_loss(x, target, smoothing=DEFAULT_SMOOTHING):
        logprobs = jax.nn.log_softmax(x.astype(jnp.float32), axis=-1)
        nll = -jnp.take_along_axis(logprobs, target[:, None], axis=-1)[:, 0]
        smooth = -jnp.mean(logprobs, axis=-1)
        return jnp.mean((1.0 - smoothing) * nll + smoothing * smooth)

    # 1) small single-block case (matches the original module's forward)
    N, C = 8, 32
    x = jax.random.normal(kx, (N, C), dtype=jnp.float32)
    target = jax.random.randint(kt, (N,), 0, C, dtype=jnp.int32)
    loss = jax.block_until_ready(label_smoothing_loss(x, target))
    assert jnp.allclose(loss, ref_loss(x, target), atol=1e-5, rtol=1e-5), (
        loss, ref_loss(x, target))

    # 2) multi-tile + 2-shard path with a ragged last tile and a clamped/duplicated
    #    trailing step (N=38 -> 5 tiles of 8 rows, 2 shards x 3 steps)
    N2, C2 = 38, 32
    x2 = jax.random.normal(kx, (N2, C2), dtype=jnp.float32)
    target2 = jax.random.randint(kt, (N2,), 0, C2, dtype=jnp.int32)
    loss2 = jax.block_until_ready(label_smoothing_loss(x2, target2, tile_n=8))
    assert jnp.allclose(loss2, ref_loss(x2, target2), atol=1e-5, rtol=1e-5), (
        loss2, ref_loss(x2, target2))

    # 3) bf16 logits path (halves HBM bytes on the memory-bound path; f32 math inside)
    x3 = x2.astype(jnp.bfloat16)
    loss3 = jax.block_until_ready(label_smoothing_loss(x3, target2, tile_n=16))
    assert jnp.allclose(loss3, ref_loss(x3, target2), atol=2e-2, rtol=2e-2), (
        loss3, ref_loss(x3, target2))

    # TODO(synk): PyTorch ignore_index semantics (e.g. -100 targets) are not
    # implemented; the original module assumes valid targets, as does this kernel.
    # TODO(synk): vocab-scale C (class dim far beyond the per-tile byte budget) would
    # need a second grid axis over C with an online max/sum-exp; not implemented here.
    print("KERNEL_OK")
</pallas_src>

<mosaic_0001>
module attributes {stable_mosaic.version = 11 : i64} {
  func.func @kernel(%arg0: i32, %arg1: i32, %arg2: memref<8x32xf32, #tpu.memory_space<vmem>>, %arg3: memref<8x1xi32, #tpu.memory_space<vmem>>, %arg4: memref<1x8x128xf32, #tpu.memory_space<vmem>>, %arg5: memref<8x1xf32, #tpu.memory_space<vmem>>) attributes {dimension_semantics = [#tpu.dimension_semantics<parallel>, #tpu.dimension_semantics<arbitrary>], iteration_bounds = array<i64: 1, 1>, scalar_prefetch = 0 : i64, scratch_operands = 1 : i64, tpu.core_type = #tpu.core_type<tc>, window_params = [{transform_indices = @transform_0, window_bounds = array<i64: 8, 32>}, {transform_indices = @transform_1, window_bounds = array<i64: 8, 1>}, {transform_indices = @transform_2, window_bounds = array<i64: 1, 8, 128>}]} {
    %c0_i32 = arith.constant 0 : i32
    %0 = arith.cmpi eq, %arg1, %c0_i32 : i32
    %1 = arith.extui %0 : i1 to i32
    %c0_i32_0 = arith.constant 0 : i32
    %2 = arith.cmpi ne, %1, %c0_i32_0 : i32
    scf.if %2 {
      %cst_16 = arith.constant 0.000000e+00 : f32
      %39 = vector.broadcast %cst_16 : f32 to vector<8x1xf32>
      %c0_17 = arith.constant 0 : index
      %c0_18 = arith.constant 0 : index
      %40 = vector.load %arg5[%c0_17, %c0_18] : memref<8x1xf32, #tpu.memory_space<vmem>>, vector<8x1xf32>
      tpu.vector_store %arg5[%c0_17, %c0_18], %39 {strides = array<i32>} : memref<8x1xf32, #tpu.memory_space<vmem>>, vector<8x1xf32>,
    } else {
    }
    %c0 = arith.constant 0 : index
    %c0_1 = arith.constant 0 : index
    %3 = vector.load %arg2[%c0, %c0_1] : memref<8x32xf32, #tpu.memory_space<vmem>>, vector<8x32xf32>
    %cst = arith.constant dense<0xFF800000> : vector<8xf32>
    %4 = vector.multi_reduction <maximumf>, %3, %cst [1] : vector<8x32xf32> to vector<8xf32>
    %5 = vector.shape_cast %4 : vector<8xf32> to vector<8x1xf32>
    %6 = vector.broadcast %5 : vector<8x1xf32> to vector<8x32xf32>
    %7 = arith.subf %3, %6 : vector<8x32xf32>
    %8 = math.exp %7 : vector<8x32xf32>
    %cst_2 = arith.constant dense<0.000000e+00> : vector<8xf32>
    %9 = vector.multi_reduction <add>, %8, %cst_2 [1] : vector<8x32xf32> to vector<8xf32>
    %10 = vector.shape_cast %9 : vector<8xf32> to vector<8x1xf32>
    %11 = math.log %10 : vector<8x1xf32>
    %12 = tpu.iota {dimensions = array<i32: 1>} : vector<8x32xi32>
    %c0_3 = arith.constant 0 : index
    %c0_4 = arith.constant 0 : index
    %13 = vector.load %arg3[%c0_3, %c0_4] : memref<8x1xi32, #tpu.memory_space<vmem>>, vector<8x1xi32>
    %14 = vector.broadcast %13 : vector<8x1xi32> to vector<8x32xi32>
    %15 = arith.cmpi eq, %12, %14 : vector<8x32xi32>
    %cst_5 = arith.constant 0.990312516 : f32
    %cst_6 = arith.constant 3.125000e-04 : f32
    %16 = vector.broadcast %cst_5 : f32 to vector<8x32xf32>
    %17 = vector.broadcast %cst_6 : f32 to vector<8x32xf32>
    %18 = arith.select %15, %16, %17 : vector<8x32xi1>, vector<8x32xf32>
    %19 = arith.mulf %18, %7 : vector<8x32xf32>
    %cst_7 = arith.constant dense<0.000000e+00> : vector<8xf32>
    %20 = vector.multi_reduction <add>, %19, %cst_7 [1] : vector<8x32xf32> to vector<8xf32>
    %21 = vector.shape_cast %20 : vector<8xf32> to vector<8x1xf32>
    %22 = arith.subf %11, %21 : vector<8x1xf32>
    %c1_i32 = arith.constant 1 : i32
    %23 = arith.muli %arg0, %c1_i32 : i32
    %24 = arith.addi %23, %arg1 : i32
    %25 = tpu.iota {dimensions = array<i32: 0>} : vector<8x1xi32>
    %c8_i32 = arith.constant 8 : i32
    %26 = arith.muli %24, %c8_i32 : i32
    %27 = vector.broadcast %26 : i32 to vector<8x1xi32>
    %28 = arith.addi %25, %27 : vector<8x1xi32>
    %c8_i32_8 = arith.constant 8 : i32
    %29 = vector.broadcast %c8_i32_8 : i32 to vector<8x1xi32>
    %30 = arith.cmpi slt, %28, %29 : vector<8x1xi32>
    %cst_9 = arith.constant 0.000000e+00 : f32
    %31 = vector.broadcast %cst_9 : f32 to vector<8x1xf32>
    %32 = arith.select %30, %22, %31 : vector<8x1xi1>, vector<8x1xf32>
    %c0_10 = arith.constant 0 : index
    %c0_11 = arith.constant 0 : index
    %33 = vector.load %arg5[%c0_10, %c0_11] : memref<8x1xf32, #tpu.memory_space<vmem>>, vector<8x1xf32>
    %34 = arith.addf %33, %32 : vector<8x1xf32>
    %c0_12 = arith.constant 0 : index
    %c0_13 = arith.constant 0 : index
    %35 = vector.load %arg5[%c0_12, %c0_13] : memref<8x1xf32, #tpu.memory_space<vmem>>, vector<8x1xf32>
    tpu.vector_store %arg5[%c0_12, %c0_13], %34 {strides = array<i32>} : memref<8x1xf32, #tpu.memory_space<vmem>>, vector<8x1xf32>,
    %c0_i32_14 = arith.constant 0 : i32
    %36 = arith.cmpi eq, %arg1, %c0_i32_14 : i32
    %37 = arith.extui %36 : i1 to i32
    %c0_i32_15 = arith.constant 0 : i32
    %38 = arith.cmpi ne, %37, %c0_i32_15 : i32
    scf.if %38 {
      %c0_16 = arith.constant 0 : index
      %c0_17 = arith.constant 0 : index
      %39 = vector.load %arg5[%c0_16, %c0_17] : memref<8x1xf32, #tpu.memory_space<vmem>>, vector<8x1xf32>
      %40 = vector.shape_cast %39 : vector<8x1xf32> to vector<1x8x1xf32>
      %cst_18 = arith.constant dense<0.000000e+00> : vector<1xf32>
      %41 = vector.multi_reduction <add>, %40, %cst_18 [1, 2] : vector<1x8x1xf32> to vector<1xf32>
      %42 = vector.shape_cast %41 : vector<1xf32> to vector<1x1x1xf32>
      %43 = vector.extract %42[0, 0, 0] : f32 from vector<1x1x1xf32>
      %44 = vector.broadcast %43 : f32 to vector<1x8x128xf32>
      %c0_19 = arith.constant 0 : index
      %c0_20 = arith.constant 0 : index
      %c0_21 = arith.constant 0 : index
      %45 = vector.load %arg4[%c0_19, %c0_20, %c0_21] : memref<1x8x128xf32, #tpu.memory_space<vmem>>, vector<1x8x128xf32>
      tpu.vector_store %arg4[%c0_19, %c0_20, %c0_21], %44 {strides = array<i32>} : memref<1x8x128xf32, #tpu.memory_space<vmem>>, vector<1x8x128xf32>,
    } else {
    }
    return
  }
  func.func @transform_0(%arg0: i32, %arg1: i32) -> (i32, i32) {
    %c1_i32 = arith.constant 1 : i32
    %0 = arith.muli %arg0, %c1_i32 : i32
    %1 = arith.addi %0, %arg1 : i32
    %c0_i32 = arith.constant 0 : i32
    %2 = arith.minsi %1, %c0_i32 : i32
    %c0_i32_0 = arith.constant 0 : i32
    %c0_i32_1 = arith.constant 0 : i32
    return %2, %c0_i32_0 : i32, i32
  }
  func.func @transform_1(%arg0: i32, %arg1: i32) -> (i32, i32) {
    %c1_i32 = arith.constant 1 : i32
    %0 = arith.muli %arg0, %c1_i32 : i32
    %1 = arith.addi %0, %arg1 : i32
    %c0_i32 = arith.constant 0 : i32
    %2 = arith.minsi %1, %c0_i32 : i32
    %c0_i32_0 = arith.constant 0 : i32
    %c0_i32_1 = arith.constant 0 : i32
    return %2, %c0_i32_0 : i32, i32
  }
  func.func @transform_2(%arg0: i32, %arg1: i32) -> (i32, i32, i32) {
    %c0_i32 = arith.constant 0 : i32
    %c0_i32_0 = arith.constant 0 : i32
    %c0_i32_1 = arith.constant 0 : i32
    return %arg0, %c0_i32, %c0_i32_0 : i32, i32, i32
  }
}

</mosaic_0001>

<llo_original>
// kernel: tpu_custom_call.1
$region0: #{tpu_custom_call.1}
  #allocation0 [shape = 'u32[]', space=smem, size = 0x4, offset = 0x4, fixed_abs, tag = 'smem constant byte address 0x4 - core index']
  #allocation1 [shape = 'u32[72,128]{1,0:T(1,128)}', space=vmem, size = 0x9000, scoped, tag = 'internal scratch']
  #allocation2 [shape = 'f32[8,1]{1,0:T(8,128)}', space=vmem, size = 0x1000, scoped, tag = 'scratch operand']
  %s0 = inlined_call_operand.vmem [shape: f32[8,32], index: 0, kind: input, shape index: {}]
  %s1 = inlined_call_operand.vmem [shape: s32[8,1], index: 1, kind: input, shape index: {}]
  %s2 = inlined_call_operand.hbm [shape: f32[1,8,128], index: 2, kind: output, shape index: {}]
  %s3 = sld [smem:[#allocation0]]
  $region26: #{tpu_custom_call.1} parent=0
    _
  %s5 = ssub.s32 1, %s3
  %s6 = scalar_select 0, %s5, %s3
  $region1: #{tpu_custom_call.1} parent=0
    #allocation3 [shape = 'u8[4096]{0}', space=vmem, size = 0x1000, scoped, tag = 'output window, operand 0, single buffered']
    #allocation4 [shape = 's32[1]{0}', space=sflag, size = 0x4, scoped, tag = 'scoped memory for tpu_custom_call.1']
    %7 = vsyncpa [#allocation4], 0
    // Predicated region
    $region2: #{tpu_custom_call.1} parent=1 // pred_check
      _
    $region3: #{tpu_custom_call.1} parent=1 // pred_check_branch
      %9 = sbr.rel (0) target = $region5
    $region4: #{tpu_custom_call.1} parent=1 // pred_region
      %s10 = sadd.s32 0, 0
      %p11 = scmp.lt.s32.totalorder %s10, 0
      %s12 = scalar_select %p11, %s10, 0
      %p13 = scmp.lt.s32.totalorder %s12, 0
      %s14 = scalar_select %p13, %s12, 0
      %s15 = smul.addr %s14, 8
      %s16 = scalar_lea.vmem %s0, %s15
      %s17 = sadd.s32 0, 0
      %p18 = scmp.lt.s32.totalorder %s17, 0
      %s19 = scalar_select %p18, %s17, 0
    $region5: #{tpu_custom_call.1} parent=1 // pred_fallthru
      _
    // Predicated region
    $region6: #{tpu_custom_call.1} parent=1 // pred_check
      _
    $region7: #{tpu_custom_call.1} parent=1 // pred_check_branch
      %21 = sbr.rel (0) target = $region9
    $region8: #{tpu_custom_call.1} parent=1 // pred_region
      %s22 = sadd.s32 0, 0
      %p23 = scmp.lt.s32.totalorder %s22, 0
      %s24 = scalar_select %p23, %s22, 0
      %p25 = scmp.lt.s32.totalorder %s24, 0
      %s26 = scalar_select %p25, %s24, 0
      %s27 = smul.addr %s26, 8
      %s28 = scalar_lea.vmem %s1, %s27
      %s29 = sadd.s32 0, 0
      %p30 = scmp.lt.s32.totalorder %s29, 0
      %s31 = scalar_select %p30, %s29, 0
    $region9: #{tpu_custom_call.1} parent=1 // pred_fallthru
      _
    %s32 = sadd.s32 0, 0
    %p33 = scmp.lt.s32.totalorder %s32, 0
    %s34 = scalar_select %p33, %s32, 0
    %p35 = scmp.lt.s32.totalorder %s34, 0
    %s36 = scalar_select %p35, %s34, 0
    %s37 = smul.addr %s36, 8
    %s38 = scalar_lea.vmem %s0, %s37
    %s39 = sadd.s32 0, 0
    %p40 = scmp.lt.s32.totalorder %s39, 0
    %s41 = scalar_select %p40, %s39, 0
    %p42 = scmp.lt.s32.totalorder %s41, 0
    %s43 = scalar_select %p42, %s41, 0
    %s44 = smul.addr %s43, 8
    %s45 = scalar_lea.vmem %s1, %s44
    %s46 = sadd.s32 0, 0
    %p47 = scmp.lt.s32.totalorder %s46, 0
    %s48 = scalar_select %p47, %s46, 0
    %p49 = scmp.lt.s32.totalorder %s48, 0
    %s50 = scalar_select %p49, %s48, 0
    %s51 = smul.addr %s50, 8
    %s52 = scalar_lea.vmem %s0, %s51
    %s53 = sadd.s32 0, 0
    %p54 = scmp.lt.s32.totalorder %s53, 0
    %s55 = scalar_select %p54, %s53, 0
    %s56 = sadd.s32 0, 0
    %p57 = scmp.lt.s32.totalorder %s56, 0
    %s58 = scalar_select %p57, %s56, 0
    %p59 = scmp.lt.s32.totalorder %s58, 0
    %s60 = scalar_select %p59, %s58, 0
    %s61 = smul.addr %s60, 8
    %s62 = scalar_lea.vmem %s1, %s61
    %s63 = sadd.s32 0, 0
    %p64 = scmp.lt.s32.totalorder %s63, 0
    %s65 = scalar_select %p64, %s63, 0
    %p66 = scmp.eq.s32.totalorder 0, 0
    // Predicated region
    $region10: #{tpu_custom_call.1} parent=1 // pred_check
      %p67 = pneg %p66
    $region11: #{tpu_custom_call.1} parent=1 // pred_check_branch
      %69 = sbr.rel (%p67) target = $region13
    $region12: #{tpu_custom_call.1} parent=1 // pred_region
      %vm70 = vcmask 7168
      %71 = vst.msk [vmem:[#allocation2] sm:$0xff] %vm70, 0.0
    $region13: #{tpu_custom_call.1} parent=1 // pred_fallthru
      _
    %v72 = vld [vmem:[%s52] sm:$0xff]
    %vm73 = vcmask 261120
    %v74 = vsel %vm73, %v72, -inf
    %75 = vmax.xlane.f32.xlu0 %v74
    %v76 = vpop.xlane.xlu0 %75
    %v77 = vsub.f32 %v72, %v76
    %v78 = vmul.f32 %v77, 1.442695
    %v79 = vpow.pop %v78
    %v80 = vsel %vm73, %v79, 0.0
    %81 = vadd.xlane.f32.xlu0 %v80
    %v82 = vpop.xlane.xlu0 %81
    %v83 = vlog2.pop %v82
    %v84 = vmul.f32 %v83, 0.6931472
    %v85 = vlaneseq
    %v86 = vand.u32 %v85, 127
    %v87 = vld [vmem:[%s62] sm:$0xff]
    %88 = vset.pattern.permute.xlu0 0
    %89 = vperm.xlu0 %88, %v87
    %v90 = vpop.permute.xlu0 %89
    %vm91 = vcmp.eq.s32.totalorder %v86, %v90
    %v92 = vsel %vm91, 0.9903125, 0.0003125
    %v93 = vmul.f32 %v92, %v77
    %v94 = vsel %vm73, %v93, 0.0
    %95 = vadd.xlane.f32.xlu0 %v94
    %v96 = vpop.xlane.xlu0 %95
    %v97 = vsub.f32 %v84, %v96
    %s98 = sadd.s32 0, 0
    %v99 = vlaneseq
    %v100 = vshrl.u32 %v99, 7
    %s101 = smul.u32 %s98, 8
    %v102 = vstv %s101
    %v103 = vadd.s32 %v100, %v102
    %vm104 = vcmp.lt.s32.totalorder %v103, 8
    %v105 = vsel %vm104, %v97, 0.0
    %v106 = vld [vmem:[#allocation2] sm:$0xff]
    %v107 = vadd.f32 %v106, %v105
    %vm108 = vcmask 7168
    %109 = vst.msk [vmem:[#allocation2] sm:$0xff] %vm108, %v107
    // Predicated region
    $region14: #{tpu_custom_call.1} parent=1 // pred_check
      %p110 = pneg %p66
    $region15: #{tpu_custom_call.1} parent=1 // pred_check_branch
      %112 = sbr.rel (%p110) target = $region17
    $region16: #{tpu_custom_call.1} parent=1 // pred_region
      %v113 = vld [vmem:[#allocation2] sm:$0xff]
      %v114 = vsel %vm108, %v113, 0.0
      %115 = vadd.xlane.f32.xlu0 %v114
      %v116 = vpop.xlane.xlu0 %115
      %v117 = vrot.slane %v116, 4
      %v118 = vadd.f32 %v116, %v117
      %v119 = vrot.slane %v118, 2
      %v120 = vadd.f32 %v118, %v119
      %v121 = vrot.slane %v120, 1
      %v122 = vadd.f32 %v120, %v121
      %s123 = vtos %v122
      %v124 = vstv %s123
      %125 = vst [vmem:[#allocation3] sm:$0xff] %v124
    $region17: #{tpu_custom_call.1} parent=1 // pred_fallthru
      _
    // Predicated region
    $region18: #{tpu_custom_call.1} parent=1 // pred_check
      _
    $region19: #{tpu_custom_call.1} parent=1 // pred_check_branch
      %127 = sbr.rel (0) target = $region21
    $region20: #{tpu_custom_call.1} parent=1 // pred_region
      %129 = vsyncadd [#allocation4], 0
      %s131 = sshll.u32 [#allocation3], 4
      %s132 = int_to_ptr.vmem [resolvable:$true] %s131
      %s133 = sshll.u32 %s2, 4
      %s134 = int_to_ptr.hbm [resolvable:$true] %s133
      %136 = dma.vmem_to_hbm [thread:$0]  %s132, 128, %s134, [#allocation4]
    $region21: #{tpu_custom_call.1} parent=1 // pred_fallthru
      _
    // Predicated region
    $region22: #{tpu_custom_call.1} parent=1 // pred_check
      _
    $region23: #{tpu_custom_call.1} parent=1 // pred_check_branch
      %138 = sbr.rel (0) target = $region25
    $region24: #{tpu_custom_call.1} parent=1 // pred_region
      %140 = dma.done [#allocation4], 128
    $region25: #{tpu_custom_call.1} parent=1 // pred_fallthru
      _
    %141 = vsyncpa [#allocation4], 1

</llo_original>
